<compile_context>
chip_gen: v7x
topology: tpu7x:2x2x1
jax: 0.10.0
libtpu: 0.0.40
codegen_flags: <defaults>
</compile_context>

<pallas_src>
import functools

import jax
import jax.numpy as jnp
from jax import lax
from jax.experimental import pallas as pl
from jax.experimental.pallas import tpu as pltpu


def _sepconv_bn_relu_kernel(x_ref, w_ref, shift_ref, mask_ref, o_ref, *,
                            H, W, KH, KW, pad, relu, compute_dtype,
                            n_tile, c_chunk, n_chunks_c):
    """One (n_tile, c_tile, H*W) block of depthwise conv + folded BN + ReLU.

    x_ref:     (n_tile, c_tile, H*W)  activations: channels on sublanes, flat H*W on lanes
    w_ref:     (c_tile, KH*KW)        depthwise taps with BN scale folded in (compute dtype)
    shift_ref: (c_tile, 1)            folded BN shift (f32)
    mask_ref:  (KH*KW, H*W)           precomputed 'same'-padding border masks (compute dtype)
    o_ref:     (n_tile, c_tile, H*W)
    """
    HW = H * W

    def chunk_body(i, carry):
        # Static indices whenever the loop collapses, dynamic (aligned) otherwise.
        if n_tile == 1 and n_chunks_c == 1:
            ni, c0 = 0, 0
        elif n_chunks_c == 1:
            ni, c0 = i, 0
        elif n_tile == 1:
            ni, c0 = 0, pl.multiple_of(i * c_chunk, c_chunk)
        else:
            ni = i // n_chunks_c
            c0 = pl.multiple_of((i - ni * n_chunks_c) * c_chunk, c_chunk)

        # One load per chunk; all KH*KW taps reuse the register-resident copy.
        xc = x_ref[ni, pl.ds(c0, c_chunk), :].astype(compute_dtype)   # (c_chunk, HW)
        wc = w_ref[pl.ds(c0, c_chunk), :]                             # (c_chunk, KH*KW)

        acc = jnp.zeros((c_chunk, HW), jnp.float32)
        for kh in range(KH):
            dy = kh - pad
            for kw in range(KW):
                dx = kw - pad
                k = kh * KW + kw
                shift = dy * W + dx
                # Gather x[h+dy, w+dx] for every output pixel with one lane roll
                # of the already-loaded chunk (XLU slot, off the VALU/vst path).
                shifted = xc if shift == 0 else pltpu.roll(xc, (-shift) % HW, axis=1)
                tap = shifted * wc[:, k:k + 1]
                if not (dy == 0 and dx == 0):
                    # Zero taps whose true input position is outside the image
                    # ('same' zero padding); mask is 0/1 so this is exact.
                    tap = tap * mask_ref[k:k + 1, :]
                acc = acc + tap.astype(jnp.float32)

        y = acc + shift_ref[pl.ds(c0, c_chunk), :]        # fused BN shift (f32)
        if relu:
            y = jnp.maximum(y, 0.0)
        o_ref[ni, pl.ds(c0, c_chunk), :] = y.astype(o_ref.dtype)
        return carry

    total = n_tile * n_chunks_c
    lax.fori_loop(0, total, chunk_body, 0, unroll=True if total <= 32 else False)


def _divisors(n):
    return [d for d in range(1, n + 1) if n % d == 0]


def _pick_tiles(N, C, HW, itemsize, budget_bytes):
    """Choose (n_tile, c_tile). c_tile must be a multiple of 8 (sublane rule) or
    the full C; the batch axis is also blocked when the channel block is small.
    Keeps the grid at >= 2 steps when possible (v7x has 2 TensorCores)."""
    if C % 8 == 0:
        c_opts = [t for t in range(8, C + 1, 8) if C % t == 0]
    else:
        c_opts = [C]
    c_tile = c_opts[0]
    for t in c_opts:
        if t * HW * itemsize <= budget_bytes:
            c_tile = t
    n_tile = 1
    for t in _divisors(N):
        if t * c_tile * HW * itemsize <= budget_bytes:
            n_tile = t
    # Megacore balance: keep at least 2 grid steps when the problem allows it.
    if (N // n_tile) * (C // c_tile) < 2:
        if n_tile > 1:
            n_tile = max(d for d in _divisors(n_tile) if d < n_tile)
        else:
            smaller = [t for t in c_opts if t < c_tile]
            if smaller:
                c_tile = smaller[-1]
    return n_tile, c_tile


def basic_sep_conv(x_nchw, weight, gamma, beta, running_mean, running_var,
                   *, padding=1, eps=1e-5, relu=True):
    """BasicSepConv forward (inference-mode BN).

    x_nchw : (N, C, H, W)    input, PyTorch layout
    weight : (C, 1, KH, KW)  depthwise conv weight, PyTorch layout
    gamma, beta, running_mean, running_var : (C,)
    Assumes stride=1, dilation=1, 'same' padding (2*padding == K-1), bias=False.
    """
    N, C, H, W = x_nchw.shape
    KH, KW = int(weight.shape[2]), int(weight.shape[3])
    if not (2 * padding == KH - 1 and 2 * padding == KW - 1):
        raise NotImplementedError(
            "only stride=1, dilation=1, 'same' padding (2*padding == K-1) is supported")
    HW = H * W
    KT = KH * KW

    in_dtype = x_nchw.dtype
    compute_dtype = jnp.bfloat16 if in_dtype == jnp.bfloat16 else jnp.float32
    itemsize = jnp.dtype(in_dtype).itemsize

    # Generation-aware VMEM budgeting (v5e/v6e: 128 MiB, v7x: 64 MiB physical).
    try:
        vmem_cap = int(getattr(pltpu.get_tpu_info(), "vmem_capacity_bytes", 64 << 20))
    except Exception:
        vmem_cap = 64 << 20
    block_budget = min(4 << 20, vmem_cap // 32)   # ~4 MiB on v5e/v6e, ~2 MiB on v7x

    # Free reshape: NCHW is contiguous, so (N, C, H, W) -> (N, C, H*W) is a view.
    x_flat = x_nchw.reshape(N, C, HW)

    # Fold BN (inference) into the depthwise weight and a per-channel shift.
    scale = gamma.astype(jnp.float32) * lax.rsqrt(running_var.astype(jnp.float32) + eps)
    w_taps = weight.reshape(C, KT).astype(jnp.float32) * scale[:, None]       # (C, KT)
    shift = (beta.astype(jnp.float32) - running_mean.astype(jnp.float32) * scale)[:, None]

    # Harden non-multiple-of-8 channel counts: only if the full-C block would blow
    # the budget, zero-pad channels so the block can be tiled (zero taps/shift ->
    # ReLU(0)=0, sliced off afterwards).
    C_eff = C
    if C % 8 != 0 and C * HW * itemsize > block_budget:
        C_eff = ((C + 7) // 8) * 8
        x_flat = jnp.pad(x_flat, ((0, 0), (0, C_eff - C), (0, 0)))
        w_taps = jnp.pad(w_taps, ((0, C_eff - C), (0, 0)))
        shift = jnp.pad(shift, ((0, C_eff - C), (0, 0)))

    w_taps = w_taps.astype(compute_dtype)

    # Precomputed 'same'-padding border masks (replaces per-tap compares + where).
    pos = jnp.arange(HW, dtype=jnp.int32)
    row, col = pos // W, pos % W
    masks = []
    for kh in range(KH):
        dy = kh - padding
        for kw in range(KW):
            dx = kw - padding
            masks.append((row + dy >= 0) & (row + dy < H) &
                         (col + dx >= 0) & (col + dx < W))
    mask = jnp.stack(masks, axis=0).astype(compute_dtype)                     # (KT, HW)

    n_tile, c_tile = _pick_tiles(N, C_eff, HW, itemsize, block_budget)

    # Channel sub-chunk kept register-resident inside the kernel.
    chunk = 16 if compute_dtype == jnp.bfloat16 else 8
    if c_tile % chunk != 0:
        chunk = 8 if c_tile % 8 == 0 else c_tile
    n_chunks_c = c_tile // chunk

    kernel = functools.partial(
        _sepconv_bn_relu_kernel, H=H, W=W, KH=KH, KW=KW, pad=padding, relu=relu,
        compute_dtype=compute_dtype, n_tile=n_tile, c_chunk=chunk,
        n_chunks_c=n_chunks_c)

    # Explicit scoped-VMEM limit: double-buffered in+out blocks + aux + headroom.
    in_block = n_tile * c_tile * HW * itemsize
    out_block = n_tile * c_tile * HW * itemsize
    aux = KT * HW * jnp.dtype(compute_dtype).itemsize + c_tile * (KT + 1) * 4
    vmem_limit = int(min(max(2 * (in_block + out_block + aux) + (8 << 20), 32 << 20),
                         vmem_cap * 3 // 4))

    flops = (2 * KT + 3) * N * C * HW
    bytes_accessed = (2 * N * C * HW * itemsize + C * (KT + 1) * 4
                      + KT * HW * jnp.dtype(compute_dtype).itemsize)

    out_flat = pl.pallas_call(
        kernel,
        out_shape=jax.ShapeDtypeStruct((N, C_eff, HW), in_dtype),
        grid=(N // n_tile, C_eff // c_tile),
        in_specs=[
            pl.BlockSpec((n_tile, c_tile, HW), lambda n, c: (n, c, 0)),
            pl.BlockSpec((c_tile, KT), lambda n, c: (c, 0)),
            pl.BlockSpec((c_tile, 1), lambda n, c: (c, 0)),
            pl.BlockSpec((KT, HW), lambda n, c: (0, 0)),
        ],
        out_specs=pl.BlockSpec((n_tile, c_tile, HW), lambda n, c: (n, c, 0)),
        compiler_params=pltpu.CompilerParams(
            dimension_semantics=("parallel", "parallel"),
            vmem_limit_bytes=vmem_limit),
        cost_estimate=pl.CostEstimate(flops=flops, transcendentals=0,
                                      bytes_accessed=bytes_accessed),
    )(x_flat, w_taps, shift, mask)

    if C_eff != C:
        out_flat = out_flat[:, :C]
    return out_flat.reshape(N, C, H, W)


def _reference(x_nchw, weight, gamma, beta, running_mean, running_var, *, padding=1, eps=1e-5):
    """Pure-JAX reference (depthwise conv via lax.conv + BN eval + ReLU)."""
    C = x_nchw.shape[1]
    y = lax.conv_general_dilated(
        x_nchw.astype(jnp.float32), weight.astype(jnp.float32),
        window_strides=(1, 1), padding=[(padding, padding), (padding, padding)],
        dimension_numbers=("NCHW", "OIHW", "NCHW"), feature_group_count=C)
    scale = (gamma / jnp.sqrt(running_var + eps)).reshape(1, C, 1, 1)
    shift = (beta - running_mean * gamma / jnp.sqrt(running_var + eps)).reshape(1, C, 1, 1)
    return jnp.maximum(y * scale + shift, 0.0).astype(x_nchw.dtype)


if __name__ == "__main__":
    key = jax.random.PRNGKey(0)
    k_x, k_w, k_g, k_b, k_m, k_v = jax.random.split(key, 6)

    N, C, H, W = 2, 4, 16, 16
    KH = KW = 3

    x = jax.random.normal(k_x, (N, C, H, W), dtype=jnp.float32)
    weight = jax.random.normal(k_w, (C, 1, KH, KW), dtype=jnp.float32) * 0.2
    gamma = 1.0 + 0.1 * jax.random.normal(k_g, (C,), dtype=jnp.float32)
    beta = 0.1 * jax.random.normal(k_b, (C,), dtype=jnp.float32)
    running_mean = 0.05 * jax.random.normal(k_m, (C,), dtype=jnp.float32)
    running_var = 1.0 + 0.2 * jax.random.uniform(k_v, (C,), dtype=jnp.float32)

    out = basic_sep_conv(x, weight, gamma, beta, running_mean, running_var, padding=1)
    out = jax.block_until_ready(out)

    ref = _reference(x, weight, gamma, beta, running_mean, running_var, padding=1)
    assert out.shape == (N, C, H, W), out.shape
    assert jnp.allclose(out, ref, atol=1e-4, rtol=1e-4), "mismatch vs reference"

    print("KERNEL_OK")
</pallas_src>

<mosaic_0001>
module attributes {stable_mosaic.version = 11 : i64} {
  func.func @_sepconv_bn_relu_kernel(%arg0: i32, %arg1: i32, %arg2: memref<1x4x256xf32, #tpu.memory_space<vmem>>, %arg3: memref<4x9xf32, #tpu.memory_space<vmem>>, %arg4: memref<4x1xf32, #tpu.memory_space<vmem>>, %arg5: memref<9x256xf32, #tpu.memory_space<vmem>>, %arg6: memref<1x4x256xf32, #tpu.memory_space<vmem>>) attributes {dimension_semantics = [#tpu.dimension_semantics<parallel>, #tpu.dimension_semantics<parallel>], iteration_bounds = array<i64: 2, 1>, scalar_prefetch = 0 : i64, scratch_operands = 0 : i64, tpu.core_type = #tpu.core_type<tc>, window_params = [{transform_indices = @transform_0, window_bounds = array<i64: 1, 4, 256>}, {transform_indices = @transform_1, window_bounds = array<i64: 4, 9>}, {transform_indices = @transform_2, window_bounds = array<i64: 4, 1>}, {pipeline_mode = #tpu.pipeline_mode<synchronous>, transform_indices = @transform_3, window_bounds = array<i64: 9, 256>}, {transform_indices = @transform_4, window_bounds = array<i64: 1, 4, 256>}]} {
    %c0_i32 = arith.constant 0 : i32
    %c0 = arith.constant 0 : index
    %c0_0 = arith.constant 0 : index
    %c0_1 = arith.constant 0 : index
    %0 = vector.load %arg2[%c0, %c0_0, %c0_1] : memref<1x4x256xf32, #tpu.memory_space<vmem>>, vector<1x4x256xf32>
    %1 = vector.shape_cast %0 : vector<1x4x256xf32> to vector<4x256xf32>
    %c0_2 = arith.constant 0 : index
    %c0_3 = arith.constant 0 : index
    %2 = vector.load %arg3[%c0_2, %c0_3] : memref<4x9xf32, #tpu.memory_space<vmem>>, vector<4x9xf32>
    %cst = arith.constant 0.000000e+00 : f32
    %3 = vector.broadcast %cst : f32 to vector<4x256xf32>
    %c17_i32 = arith.constant 17 : i32
    %4 = tpu.dynamic_rotate %1 by %c17_i32 dim 1 : vector<4x256xf32>, i32 -> vector<4x256xf32>
    %5 = vector.extract_strided_slice %2 {offsets = [0, 0], sizes = [4, 1], strides = [1, 1]} : vector<4x9xf32> to vector<4x1xf32>
    %6 = vector.broadcast %5 : vector<4x1xf32> to vector<4x256xf32>
    %7 = arith.mulf %4, %6 : vector<4x256xf32>
    %c0_4 = arith.constant 0 : index
    %c0_5 = arith.constant 0 : index
    %8 = vector.load %arg5[%c0_4, %c0_5] : memref<9x256xf32, #tpu.memory_space<vmem>>, vector<1x256xf32>
    %9 = vector.broadcast %8 : vector<1x256xf32> to vector<4x256xf32>
    %10 = arith.mulf %7, %9 : vector<4x256xf32>
    %11 = arith.addf %3, %10 : vector<4x256xf32>
    %c16_i32 = arith.constant 16 : i32
    %12 = tpu.dynamic_rotate %1 by %c16_i32 dim 1 : vector<4x256xf32>, i32 -> vector<4x256xf32>
    %13 = vector.extract_strided_slice %2 {offsets = [0, 1], sizes = [4, 1], strides = [1, 1]} : vector<4x9xf32> to vector<4x1xf32>
    %14 = vector.broadcast %13 : vector<4x1xf32> to vector<4x256xf32>
    %15 = arith.mulf %12, %14 : vector<4x256xf32>
    %c1 = arith.constant 1 : index
    %c0_6 = arith.constant 0 : index
    %16 = vector.load %arg5[%c1, %c0_6] : memref<9x256xf32, #tpu.memory_space<vmem>>, vector<1x256xf32>
    %17 = vector.broadcast %16 : vector<1x256xf32> to vector<4x256xf32>
    %18 = arith.mulf %15, %17 : vector<4x256xf32>
    %19 = arith.addf %11, %18 : vector<4x256xf32>
    %c15_i32 = arith.constant 15 : i32
    %20 = tpu.dynamic_rotate %1 by %c15_i32 dim 1 : vector<4x256xf32>, i32 -> vector<4x256xf32>
    %21 = vector.extract_strided_slice %2 {offsets = [0, 2], sizes = [4, 1], strides = [1, 1]} : vector<4x9xf32> to vector<4x1xf32>
    %22 = vector.broadcast %21 : vector<4x1xf32> to vector<4x256xf32>
    %23 = arith.mulf %20, %22 : vector<4x256xf32>
    %c2 = arith.constant 2 : index
    %c0_7 = arith.constant 0 : index
    %24 = vector.load %arg5[%c2, %c0_7] : memref<9x256xf32, #tpu.memory_space<vmem>>, vector<1x256xf32>
    %25 = vector.broadcast %24 : vector<1x256xf32> to vector<4x256xf32>
    %26 = arith.mulf %23, %25 : vector<4x256xf32>
    %27 = arith.addf %19, %26 : vector<4x256xf32>
    %c1_i32 = arith.constant 1 : i32
    %28 = tpu.dynamic_rotate %1 by %c1_i32 dim 1 : vector<4x256xf32>, i32 -> vector<4x256xf32>
    %29 = vector.extract_strided_slice %2 {offsets = [0, 3], sizes = [4, 1], strides = [1, 1]} : vector<4x9xf32> to vector<4x1xf32>
    %30 = vector.broadcast %29 : vector<4x1xf32> to vector<4x256xf32>
    %31 = arith.mulf %28, %30 : vector<4x256xf32>
    %c3 = arith.constant 3 : index
    %c0_8 = arith.constant 0 : index
    %32 = vector.load %arg5[%c3, %c0_8] : memref<9x256xf32, #tpu.memory_space<vmem>>, vector<1x256xf32>
    %33 = vector.broadcast %32 : vector<1x256xf32> to vector<4x256xf32>
    %34 = arith.mulf %31, %33 : vector<4x256xf32>
    %35 = arith.addf %27, %34 : vector<4x256xf32>
    %36 = vector.extract_strided_slice %2 {offsets = [0, 4], sizes = [4, 1], strides = [1, 1]} : vector<4x9xf32> to vector<4x1xf32>
    %37 = vector.broadcast %36 : vector<4x1xf32> to vector<4x256xf32>
    %38 = arith.mulf %1, %37 : vector<4x256xf32>
    %39 = arith.addf %35, %38 : vector<4x256xf32>
    %c255_i32 = arith.constant 255 : i32
    %40 = tpu.dynamic_rotate %1 by %c255_i32 dim 1 : vector<4x256xf32>, i32 -> vector<4x256xf32>
    %41 = vector.extract_strided_slice %2 {offsets = [0, 5], sizes = [4, 1], strides = [1, 1]} : vector<4x9xf32> to vector<4x1xf32>
    %42 = vector.broadcast %41 : vector<4x1xf32> to vector<4x256xf32>
    %43 = arith.mulf %40, %42 : vector<4x256xf32>
    %c5 = arith.constant 5 : index
    %c0_9 = arith.constant 0 : index
    %44 = vector.load %arg5[%c5, %c0_9] : memref<9x256xf32, #tpu.memory_space<vmem>>, vector<1x256xf32>
    %45 = vector.broadcast %44 : vector<1x256xf32> to vector<4x256xf32>
    %46 = arith.mulf %43, %45 : vector<4x256xf32>
    %47 = arith.addf %39, %46 : vector<4x256xf32>
    %c241_i32 = arith.constant 241 : i32
    %48 = tpu.dynamic_rotate %1 by %c241_i32 dim 1 : vector<4x256xf32>, i32 -> vector<4x256xf32>
    %49 = vector.extract_strided_slice %2 {offsets = [0, 6], sizes = [4, 1], strides = [1, 1]} : vector<4x9xf32> to vector<4x1xf32>
    %50 = vector.broadcast %49 : vector<4x1xf32> to vector<4x256xf32>
    %51 = arith.mulf %48, %50 : vector<4x256xf32>
    %c6 = arith.constant 6 : index
    %c0_10 = arith.constant 0 : index
    %52 = vector.load %arg5[%c6, %c0_10] : memref<9x256xf32, #tpu.memory_space<vmem>>, vector<1x256xf32>
    %53 = vector.broadcast %52 : vector<1x256xf32> to vector<4x256xf32>
    %54 = arith.mulf %51, %53 : vector<4x256xf32>
    %55 = arith.addf %47, %54 : vector<4x256xf32>
    %c240_i32 = arith.constant 240 : i32
    %56 = tpu.dynamic_rotate %1 by %c240_i32 dim 1 : vector<4x256xf32>, i32 -> vector<4x256xf32>
    %57 = vector.extract_strided_slice %2 {offsets = [0, 7], sizes = [4, 1], strides = [1, 1]} : vector<4x9xf32> to vector<4x1xf32>
    %58 = vector.broadcast %57 : vector<4x1xf32> to vector<4x256xf32>
    %59 = arith.mulf %56, %58 : vector<4x256xf32>
    %c7 = arith.constant 7 : index
    %c0_11 = arith.constant 0 : index
    %60 = vector.load %arg5[%c7, %c0_11] : memref<9x256xf32, #tpu.memory_space<vmem>>, vector<1x256xf32>
    %61 = vector.broadcast %60 : vector<1x256xf32> to vector<4x256xf32>
    %62 = arith.mulf %59, %61 : vector<4x256xf32>
    %63 = arith.addf %55, %62 : vector<4x256xf32>
    %c239_i32 = arith.constant 239 : i32
    %64 = tpu.dynamic_rotate %1 by %c239_i32 dim 1 : vector<4x256xf32>, i32 -> vector<4x256xf32>
    %65 = vector.extract_strided_slice %2 {offsets = [0, 8], sizes = [4, 1], strides = [1, 1]} : vector<4x9xf32> to vector<4x1xf32>
    %66 = vector.broadcast %65 : vector<4x1xf32> to vector<4x256xf32>
    %67 = arith.mulf %64, %66 : vector<4x256xf32>
    %c8 = arith.constant 8 : index
    %c0_12 = arith.constant 0 : index
    %68 = vector.load %arg5[%c8, %c0_12] : memref<9x256xf32, #tpu.memory_space<vmem>>, vector<1x256xf32>
    %69 = vector.broadcast %68 : vector<1x256xf32> to vector<4x256xf32>
    %70 = arith.mulf %67, %69 : vector<4x256xf32>
    %71 = arith.addf %63, %70 : vector<4x256xf32>
    %c0_13 = arith.constant 0 : index
    %c0_14 = arith.constant 0 : index
    %72 = vector.load %arg4[%c0_13, %c0_14] : memref<4x1xf32, #tpu.memory_space<vmem>>, vector<4x1xf32>
    %73 = vector.broadcast %72 : vector<4x1xf32> to vector<4x256xf32>
    %74 = arith.addf %71, %73 : vector<4x256xf32>
    %cst_15 = arith.constant 0.000000e+00 : f32
    %75 = vector.broadcast %cst_15 : f32 to vector<4x256xf32>
    %76 = arith.maximumf %74, %75 : vector<4x256xf32>
    %c0_16 = arith.constant 0 : index
    %c0_17 = arith.constant 0 : index
    %c0_18 = arith.constant 0 : index
    %77 = vector.load %arg6[%c0_16, %c0_17, %c0_18] : memref<1x4x256xf32, #tpu.memory_space<vmem>>, vector<1x4x256xf32>
    %78 = vector.shape_cast %77 : vector<1x4x256xf32> to vector<4x256xf32>
    %79 = vector.shape_cast %76 : vector<4x256xf32> to vector<1x4x256xf32>
    tpu.vector_store %arg6[%c0_16, %c0_17, %c0_18], %79 {strides = array<i32>} : memref<1x4x256xf32, #tpu.memory_space<vmem>>, vector<1x4x256xf32>,
    return
  }
  func.func @transform_0(%arg0: i32, %arg1: i32) -> (i32, i32, i32) {
    %c0_i32 = arith.constant 0 : i32
    %c0_i32_0 = arith.constant 0 : i32
    return %arg0, %arg1, %c0_i32 : i32, i32, i32
  }
  func.func @transform_1(%arg0: i32, %arg1: i32) -> (i32, i32) {
    %c0_i32 = arith.constant 0 : i32
    %c0_i32_0 = arith.constant 0 : i32
    return %arg1, %c0_i32 : i32, i32
  }
  func.func @transform_2(%arg0: i32, %arg1: i32) -> (i32, i32) {
    %c0_i32 = arith.constant 0 : i32
    %c0_i32_0 = arith.constant 0 : i32
    return %arg1, %c0_i32 : i32, i32
  }
  func.func @transform_3(%arg0: i32, %arg1: i32) -> (i32, i32) {
    %c0_i32 = arith.constant 0 : i32
    %c0_i32_0 = arith.constant 0 : i32
    %c0_i32_1 = arith.constant 0 : i32
    return %c0_i32, %c0_i32_0 : i32, i32
  }
  func.func @transform_4(%arg0: i32, %arg1: i32) -> (i32, i32, i32) {
    %c0_i32 = arith.constant 0 : i32
    %c0_i32_0 = arith.constant 0 : i32
    return %arg0, %arg1, %c0_i32 : i32, i32, i32
  }
}

</mosaic_0001>

<llo_original>
// kernel: tpu_custom_call.1
$region0: #{tpu_custom_call.1}
  #allocation0 [shape = 'u32[]', space=smem, size = 0x4, offset = 0x4, fixed_abs, tag = 'smem constant byte address 0x4 - core index']
  #allocation1 [shape = 'u32[144,128]{1,0:T(1,128)}', space=vmem, size = 0x12000, scoped, tag = 'internal scratch']
  %s0 = inlined_call_operand.hbm [shape: f32[2,4,256], index: 0, kind: input, shape index: {}]
  %s1 = inlined_call_operand.vmem [shape: f32[4,9], index: 1, kind: input, shape index: {}]
  %s2 = inlined_call_operand.vmem [shape: f32[4,1], index: 2, kind: input, shape index: {}]
  %s3 = inlined_call_operand.hbm [shape: f32[9,256], index: 3, kind: input, shape index: {}]
  %s4 = inlined_call_operand.hbm [shape: f32[2,4,256], index: 4, kind: output, shape index: {}]
  %s5 = sld [smem:[#allocation0]]
  $region57: #{tpu_custom_call.1} parent=0
    _
  %s7 = ssub.s32 1, %s5
  %s8 = scalar_select 0, %s7, %s5
  $region1: #{tpu_custom_call.1} parent=0
    #allocation2 [shape = 'u8[8192]{0}', space=vmem, size = 0x2000, scoped, tag = 'input window, operand 0']
    #allocation3 [shape = 's32[2]{0}', space=sflag, size = 0x8, scoped, tag = 'scoped memory for tpu_custom_call.1']
    #allocation4 [shape = 's32[2]{0}', space=sflag, size = 0x8, scoped, tag = 'scoped memory for tpu_custom_call.1']
    #allocation5 [shape = 'u8[16384]{0}', space=vmem, size = 0x4000, scoped, tag = 'input window, operand 3, single buffered']
    #allocation6 [shape = 's32[1]{0}', space=sflag, size = 0x4, scoped, tag = 'scoped memory for tpu_custom_call.1']
    #allocation7 [shape = 'u8[8192]{0}', space=vmem, size = 0x2000, scoped, tag = 'output window, operand 0']
    %9 = vsyncpa [#allocation3], 0
    %s10 = scalar_lea.sflag [#allocation3], 1
    %11 = vsyncpa %s10, 0
    %12 = vsyncpa [#allocation6], 0
    %13 = vsyncpa [#allocation4], 0
    %s14 = scalar_lea.sflag [#allocation4], 1
    %15 = vsyncpa %s14, 0
    loop: start=0, step=1, limit=4
    $region2: #{tpu_custom_call.1} parent=1 // loop_pre_header
      _
    $region3: #{tpu_custom_call.1} parent=1 // loop_header
      %s17 = sphi 0, %s21
      %p18 = scmp.ge.s32.totalorder %s17, 4
      %s24 = sphi 0, %s36
      %s25 = sphi 0, %s32
      %s26 = sphi 0, %s24
      %s27 = sphi 0, %s25
      %s28 = sphi 0, %s26
      %s29 = sphi 0, %s27
      %s41 = sphi 0, %s43
      %s44 = sphi 0, %s41
      %s45 = sphi 0, %s44
      %s61 = sphi 0, %s45
      %s67 = sphi 0, %s69
      %s70 = sphi 0, %s67
      %s71 = sphi 0, %s70
      %s87 = sphi 0, %s71
      %s93 = sphi 0, %s95
      %s96 = sphi 0, %s93
      %s97 = sphi 0, %s96
      %s113 = sphi 0, %s97
      %s117 = sphi 0, %s117
      %s119 = sphi 0, %s117
      %s120 = sphi 0, %s119
      %s134 = sphi 0, %s120
      %s142 = sphi 0, %s144
      %s145 = sphi 0, %s142
      %s146 = sphi 0, %s145
      %s162 = sphi 0, %s146
    $region4: #{tpu_custom_call.1} parent=1 // loop_header_branch
      %20 = sbr.rel (%p18) target = $region8
    $region5: #{tpu_custom_call.1} parent=1 // loop_body
      %s22 = ssub.s32 %s17, 1
      %s23 = ssub.s32 %s17, 2
      %s30 = sadd.s32 1, %s25
      %p31 = scmp.ge.s32.totalorder %s30, 1
      %s32 = scalar_select %p31, 0, %s30
      %s33 = sadd.s32 1, %s24
      %s34 = scalar_select %p31, %s33, %s24
      %p35 = scmp.ge.s32.totalorder %s34, 2
      %s36 = scalar_select %p35, 0, %s34
      %s37 = ssub.s32 %s24, %s36
      %s38 = ssub.s32 %s25, %s32
      %s39 = sor.u32 %s37, %s38
      %p40 = scmp.eq.s32.totalorder %s39, 0
      %s42 = sadd.s32 %s41, 1
      %s43 = scalar_select %p40, %s41, %s42
      %p46 = pneg %p40
      %p47 = scmp.eq.s32.totalorder %s17, 1
      %p48 = por %p46, %p47
      %p49 = scmp.ne.s32.totalorder %s41, %s44
      %p50 = scmp.eq.s32.totalorder %s17, 0
      %p51 = por %p49, %p50
      %p52 = scmp.ne.s32.totalorder %s41, %s44
      %p53 = scmp.eq.s32.totalorder %s22, 1
      %p54 = por %p52, %p53
      %p55 = scmp.ne.s32.totalorder %s44, %s45
      %p56 = scmp.eq.s32.totalorder %s22, 0
      %p57 = por %p55, %p56
      %p58 = scmp.ne.s32.totalorder %s44, %s45
      %p59 = scmp.eq.s32.totalorder %s23, 1
      %p60 = por %p58, %p59
      %p62 = scmp.ne.s32.totalorder %s45, %s61
      %p63 = scmp.eq.s32.totalorder %s23, 0
      %p64 = por %p62, %p63
      %s65 = ssub.s32 %s25, %s32
      %p66 = scmp.eq.s32.totalorder %s65, 0
      %s68 = sadd.s32 %s67, 1
      %s69 = scalar_select %p66, %s67, %s68
      %p72 = pneg %p66
      %p73 = scmp.eq.s32.totalorder %s17, 1
      %p74 = por %p72, %p73
      %p75 = scmp.ne.s32.totalorder %s67, %s70
      %p76 = scmp.eq.s32.totalorder %s17, 0
      %p77 = por %p75, %p76
      %p78 = scmp.ne.s32.totalorder %s67, %s70
      %p79 = scmp.eq.s32.totalorder %s22, 1
      %p80 = por %p78, %p79
      %p81 = scmp.ne.s32.totalorder %s70, %s71
      %p82 = scmp.eq.s32.totalorder %s22, 0
      %p83 = por %p81, %p82
      %p84 = scmp.ne.s32.totalorder %s70, %s71
      %p85 = scmp.eq.s32.totalorder %s23, 1
      %p86 = por %p84, %p85
      %p88 = scmp.ne.s32.totalorder %s71, %s87
      %p89 = scmp.eq.s32.totalorder %s23, 0
      %p90 = por %p88, %p89
      %s91 = ssub.s32 %s25, %s32
      %p92 = scmp.eq.s32.totalorder %s91, 0
      %s94 = sadd.s32 %s93, 1
      %s95 = scalar_select %p92, %s93, %s94
      %p98 = pneg %p92
      %p99 = scmp.eq.s32.totalorder %s17, 1
      %p100 = por %p98, %p99
      %p101 = scmp.ne.s32.totalorder %s93, %s96
      %p102 = scmp.eq.s32.totalorder %s17, 0
      %p103 = por %p101, %p102
      %p104 = scmp.ne.s32.totalorder %s93, %s96
      %p105 = scmp.eq.s32.totalorder %s22, 1
      %p106 = por %p104, %p105
      %p107 = scmp.ne.s32.totalorder %s96, %s97
      %p108 = scmp.eq.s32.totalorder %s22, 0
      %p109 = por %p107, %p108
      %p110 = scmp.ne.s32.totalorder %s96, %s97
      %p111 = scmp.eq.s32.totalorder %s23, 1
      %p112 = por %p110, %p111
      %p114 = scmp.ne.s32.totalorder %s97, %s113
      %p115 = scmp.eq.s32.totalorder %s23, 0
      %p116 = por %p114, %p115
      %s118 = sadd.s32 %s117, 1
      %p121 = scmp.eq.s32.totalorder %s17, 1
      %p122 = scmp.ne.s32.totalorder %s117, %s119
      %p123 = scmp.eq.s32.totalorder %s17, 0
      %p124 = por %p122, %p123
      %p125 = scmp.ne.s32.totalorder %s117, %s119
      %p126 = scmp.eq.s32.totalorder %s22, 1
      %p127 = por %p125, %p126
      %p128 = scmp.ne.s32.totalorder %s119, %s120
      %p129 = scmp.eq.s32.totalorder %s22, 0
      %p130 = por %p128, %p129
      %p131 = scmp.ne.s32.totalorder %s119, %s120
      %p132 = scmp.eq.s32.totalorder %s23, 1
      %p133 = por %p131, %p132
      %p135 = scmp.ne.s32.totalorder %s120, %s134
      %p136 = scmp.eq.s32.totalorder %s23, 0
      %p137 = por %p135, %p136
      %s138 = ssub.s32 %s24, %s36
      %s139 = ssub.s32 %s25, %s32
      %s140 = sor.u32 %s138, %s139
      %p141 = scmp.eq.s32.totalorder %s140, 0
      %s143 = sadd.s32 %s142, 1
      %s144 = scalar_select %p141, %s142, %s143
      %p147 = pneg %p141
      %p148 = scmp.eq.s32.totalorder %s17, 1
      %p149 = por %p147, %p148
      %p150 = scmp.ne.s32.totalorder %s142, %s145
      %p151 = scmp.eq.s32.totalorder %s17, 0
      %p152 = por %p150, %p151
      %p153 = scmp.ne.s32.totalorder %s142, %s145
      %p154 = scmp.eq.s32.totalorder %s22, 1
      %p155 = por %p153, %p154
      %p156 = scmp.ne.s32.totalorder %s145, %s146
      %p157 = scmp.eq.s32.totalorder %s22, 0
      %p158 = por %p156, %p157
      %p159 = scmp.ne.s32.totalorder %s145, %s146
      %p160 = scmp.eq.s32.totalorder %s23, 1
      %p161 = por %p159, %p160
      %p163 = scmp.ne.s32.totalorder %s146, %s162
      %p164 = scmp.eq.s32.totalorder %s23, 0
      %p165 = por %p163, %p164
      %p166 = scmp.le.s32.totalorder 1, %s17
      %p167 = scmp.lt.s32.totalorder %s17, 3
      %p168 = pnand %p166, %p167
      %p169 = pneg %p168
      // Predicated region
      $region9: #{tpu_custom_call.1} parent=5 // pred_check
        _
      $region10: #{tpu_custom_call.1} parent=5 // pred_check_branch
        %171 = sbr.rel (%p168) target = $region12
      $region11: #{tpu_custom_call.1} parent=5 // pred_region
        %s172 = ssub.s32 %s17, 1
        // Predicated region
        $region13: #{tpu_custom_call.1} parent=11 // pred_check
          %p173 = pneg %p83
        $region14: #{tpu_custom_call.1} parent=11 // pred_check_branch
          %175 = sbr.rel (%p173) target = $region16
        $region15: #{tpu_custom_call.1} parent=11 // pred_region
          %p176 = scmp.lt.s32.totalorder %s27, 0
          %s177 = scalar_select %p176, %s27, 0
          %s178 = smul.addr %s177, 4
          %s179 = scalar_lea.vmem %s1, %s178
        $region16: #{tpu_custom_call.1} parent=11 // pred_fallthru
          _
        // Predicated region
        $region17: #{tpu_custom_call.1} parent=11 // pred_check
          %p180 = pneg %p109
        $region18: #{tpu_custom_call.1} parent=11 // pred_check_branch
          %182 = sbr.rel (%p180) target = $region20
        $region19: #{tpu_custom_call.1} parent=11 // pred_region
          %p183 = scmp.lt.s32.totalorder %s27, 0
          %s184 = scalar_select %p183, %s27, 0
          %s185 = smul.addr %s184, 4
          %s186 = scalar_lea.vmem %s2, %s185
        $region20: #{tpu_custom_call.1} parent=11 // pred_fallthru
          _
        // Predicated region
        $region21: #{tpu_custom_call.1} parent=11 // pred_check
          %p187 = pneg %p130
        $region22: #{tpu_custom_call.1} parent=11 // pred_check_branch
          %189 = sbr.rel (%p187) target = $region24
        $region23: #{tpu_custom_call.1} parent=11 // pred_region
          %s191 = ssub.s32 512, 512
          %192 = vsyncadd [#allocation6], %s191
          %s193 = sshll.u32 [#allocation5], 4
          %s194 = int_to_ptr.vmem [resolvable:$true] %s193
          %199 = dma.hbm_to_vmem [thread:$0]  %s3, 512, %s194, [#allocation6], 256, 256, 16
        $region24: #{tpu_custom_call.1} parent=11 // pred_fallthru
          _
      $region12: #{tpu_custom_call.1} parent=5 // pred_fallthru
        _
      %p200 = scmp.lt.s32.totalorder %s17, 2
      // Predicated region
      $region25: #{tpu_custom_call.1} parent=5 // pred_check
        %p201 = pneg %p200
      $region26: #{tpu_custom_call.1} parent=5 // pred_check_branch
        %203 = sbr.rel (%p201) target = $region28
      $region27: #{tpu_custom_call.1} parent=5 // pred_region
        // Predicated region
        $region29: #{tpu_custom_call.1} parent=27 // pred_check
          %p204 = pneg %p51
        $region30: #{tpu_custom_call.1} parent=27 // pred_check_branch
          %206 = sbr.rel (%p204) target = $region32
        $region31: #{tpu_custom_call.1} parent=27 // pred_region
          %s207 = sand.u32 %s41, 1
          %s208 = scalar_lea.sflag [#allocation3], %s207
          %s209 = sand.u32 %s41, 1
          %s210 = smul.addr %s209, 8
          %s211 = scalar_lea.vmem [#allocation2], %s210
          %s213 = ssub.s32 128, 128
          %214 = vsyncadd %s208, %s213
          %s215 = smul.addr %s25, 2
          %s216 = smul.addr %s24, 2
          %s217 = sadd.s32 %s215, %s216
          %s218 = smul.addr %s217, 64
          %s219 = scalar_lea.hbm %s0, %s218
          %s221 = sshll.u32 %s211, 4
          %s222 = int_to_ptr.vmem [resolvable:$true] %s221
          %224 = dma.hbm_to_vmem [thread:$0]  %s219, 128, %s222, %s208
        $region32: #{tpu_custom_call.1} parent=27 // pred_fallthru
          _
      $region28: #{tpu_custom_call.1} parent=5 // pred_fallthru
        _
      %p225 = scmp.le.s32.totalorder 1, %s17
      %p226 = scmp.lt.s32.totalorder %s17, 3
      %p227 = pnand %p225, %p226
      %p228 = pneg %p227
      // Predicated region
      $region33: #{tpu_custom_call.1} parent=5 // pred_check
        _
      $region34: #{tpu_custom_call.1} parent=5 // pred_check_branch
        %230 = sbr.rel (%p227) target = $region36
      $region35: #{tpu_custom_call.1} parent=5 // pred_region
        %s231 = ssub.s32 %s17, 1
        %s232 = sand.u32 %s44, 1
        %s233 = scalar_lea.sflag [#allocation3], %s232
        %s234 = sand.u32 %s44, 1
        %s235 = smul.addr %s234, 8
        %s236 = scalar_lea.vmem [#allocation2], %s235
        // Predicated region
        $region37: #{tpu_custom_call.1} parent=35 // pred_check
          %p237 = pneg %p57
        $region38: #{tpu_custom_call.1} parent=35 // pred_check_branch
          %239 = sbr.rel (%p237) target = $region40
        $region39: #{tpu_custom_call.1} parent=35 // pred_region
          %240 = dma.done %s233, 128
        $region40: #{tpu_custom_call.1} parent=35 // pred_fallthru
          _
        // Predicated region
        $region41: #{tpu_custom_call.1} parent=35 // pred_check
          %p241 = pneg %p130
        $region42: #{tpu_custom_call.1} parent=35 // pred_check_branch
          %243 = sbr.rel (%p241) target = $region44
        $region43: #{tpu_custom_call.1} parent=35 // pred_region
          %244 = dma.done [#allocation6], 512
        $region44: #{tpu_custom_call.1} parent=35 // pred_fallthru
          _
        %s245 = sand.u32 %s44, 1
        %s246 = scalar_lea.sflag [#allocation3], %s245
        %s247 = sand.u32 %s44, 1
        %s248 = smul.addr %s247, 8
        %s249 = scalar_lea.vmem [#allocation2], %s248
        %p250 = pneg %p57
        %p251 = pneg %p54
        %p252 = scmp.lt.s32.totalorder %s27, 0
        %s253 = scalar_select %p252, %s27, 0
        %s254 = smul.addr %s253, 4
        %s255 = scalar_lea.vmem %s1, %s254
        %p256 = pneg %p83
        %p257 = pneg %p80
        %p258 = scmp.lt.s32.totalorder %s27, 0
        %s259 = scalar_select %p258, %s27, 0
        %s260 = smul.addr %s259, 4
        %s261 = scalar_lea.vmem %s2, %s260
        %p262 = pneg %p109
        %p263 = pneg %p106
        %p264 = pneg %p130
        %p265 = pneg %p127
        %p266 = pneg %p158
        %p267 = pneg %p155
        %s268 = sand.u32 %s145, 1
        %s269 = scalar_lea.sflag [#allocation4], %s268
        %s270 = sand.u32 %s145, 1
        %s271 = smul.addr %s270, 8
        %s272 = scalar_lea.vmem [#allocation7], %s271
        %p273 = scmp.lt.s32.totalorder %s27, 0
        %s274 = scalar_select %p273, %s27, 0
        %s275 = smul.addr %s274, 4
        %s276 = scalar_lea.vmem %s1, %s275
        %p277 = scmp.lt.s32.totalorder %s27, 0
        %s278 = scalar_select %p277, %s27, 0
        %s279 = smul.addr %s278, 4
        %s280 = scalar_lea.vmem %s2, %s279
        %v281 = vld [vmem:[%s236] sm:$0xff]
        %v282 = vld [vmem:[%s276] sm:$0xf]
        %v284 = vcombine.high %v281, %v281
        %286 = vrot.lane.b32.xlu0 %v281, 17
        %v287 = vpop.permute.xlu0 %286
        %288 = vrot.lane.b32.xlu0 %v284, 17
        %v289 = vpop.permute.xlu0 %288
        %v290 = vlaneseq
        %v291 = vand.u32 %v290, 127
        %vm292 = vcmp.lt.s32.totalorder %v291, 17
        %v293 = vsel %vm292, %v287, %v289
        %v294 = vsel %vm292, %v289, %v287
        %296 = vset.pattern.permute.xlu0 0
        %297 = vperm.xlu0 %296, %v282
        %v298 = vpop.permute.xlu0 %297
        %v300 = vmul.f32 %v294, %v298
        %v301 = vmul.f32 %v293, %v298
        %v302 = vld [vmem:[#allocation5] ss:$8 sm:$0x3]
        %v304 = vlaneseq
        %v305 = vshrl.u32 %v304, 7
        %v306 = vsub.s32 0, %v305
        %v307 = vrot.slane %v302, %v306
        %v308 = vlaneseq
        %v309 = vshrl.u32 %v308, 7
        %v310 = vsub.s32 1, %v309
        %v311 = vrot.slane %v302, %v310
        %v314 = vmul.f32 %v300, %v307
        %v315 = vmul.f32 %v301, %v311
        %v316 = vadd.f32 %v314, 0.0
        %v317 = vadd.f32 %v315, 0.0
        %318 = vrot.lane.b32.xlu0 %v281, 16
        %v319 = vpop.permute.xlu0 %318
        %320 = vrot.lane.b32.xlu0 %v284, 16
        %v321 = vpop.permute.xlu0 %320
        %vm322 = vcmp.lt.s32.totalorder %v291, 16
        %v323 = vsel %vm322, %v319, %v321
        %v324 = vsel %vm322, %v321, %v319
        %325 = vset.pattern.permute.xlu0 1
        %326 = vperm.xlu0 %325, %v282
        %v327 = vpop.permute.xlu0 %326
        %v329 = vmul.f32 %v324, %v327
        %v330 = vmul.f32 %v323, %v327
        %s331 = scalar_lea.vmem [#allocation5], 1
        %v332 = vld [vmem:[%s331] ss:$8 sm:$0x3]
        %v334 = vlaneseq
        %v335 = vshrl.u32 %v334, 7
        %v336 = vsub.s32 0, %v335
        %v337 = vrot.slane %v332, %v336
        %v338 = vlaneseq
        %v339 = vshrl.u32 %v338, 7
        %v340 = vsub.s32 1, %v339
        %v341 = vrot.slane %v332, %v340
        %v344 = vmul.f32 %v329, %v337
        %v345 = vmul.f32 %v330, %v341
        %v346 = vadd.f32 %v316, %v344
        %v347 = vadd.f32 %v317, %v345
        %348 = vrot.lane.b32.xlu0 %v281, 15
        %v349 = vpop.permute.xlu0 %348
        %350 = vrot.lane.b32.xlu0 %v284, 15
        %v351 = vpop.permute.xlu0 %350
        %vm352 = vcmp.lt.s32.totalorder %v291, 15
        %v353 = vsel %vm352, %v349, %v351
        %v354 = vsel %vm352, %v351, %v349
        %355 = vset.pattern.permute.xlu0 2
        %356 = vperm.xlu0 %355, %v282
        %v357 = vpop.permute.xlu0 %356
        %v359 = vmul.f32 %v354, %v357
        %v360 = vmul.f32 %v353, %v357
        %s361 = scalar_lea.vmem [#allocation5], 2
        %v362 = vld [vmem:[%s361] ss:$8 sm:$0x3]
        %v364 = vlaneseq
        %v365 = vshrl.u32 %v364, 7
        %v366 = vsub.s32 0, %v365
        %v367 = vrot.slane %v362, %v366
        %v368 = vlaneseq
        %v369 = vshrl.u32 %v368, 7
        %v370 = vsub.s32 1, %v369
        %v371 = vrot.slane %v362, %v370
        %v374 = vmul.f32 %v359, %v367
        %v375 = vmul.f32 %v360, %v371
        %v376 = vadd.f32 %v346, %v374
        %v377 = vadd.f32 %v347, %v375
        %378 = vrot.lane.b32.xlu0 %v281, 1
        %v379 = vpop.permute.xlu0 %378
        %380 = vrot.lane.b32.xlu0 %v284, 1
        %v381 = vpop.permute.xlu0 %380
        %vm382 = vcmp.lt.s32.totalorder %v291, 1
        %v383 = vsel %vm382, %v379, %v381
        %v384 = vsel %vm382, %v381, %v379
        %385 = vset.pattern.permute.xlu0 3
        %386 = vperm.xlu0 %385, %v282
        %v387 = vpop.permute.xlu0 %386
        %v389 = vmul.f32 %v384, %v387
        %v390 = vmul.f32 %v383, %v387
        %s391 = scalar_lea.vmem [#allocation5], 3
        %v392 = vld [vmem:[%s391] ss:$8 sm:$0x3]
        %v394 = vlaneseq
        %v395 = vshrl.u32 %v394, 7
        %v396 = vsub.s32 0, %v395
        %v397 = vrot.slane %v392, %v396
        %v398 = vlaneseq
        %v399 = vshrl.u32 %v398, 7
        %v400 = vsub.s32 1, %v399
        %v401 = vrot.slane %v392, %v400
        %v404 = vmul.f32 %v389, %v397
        %v405 = vmul.f32 %v390, %v401
        %v406 = vadd.f32 %v376, %v404
        %v407 = vadd.f32 %v377, %v405
        %408 = vset.pattern.permute.xlu0 4
        %409 = vperm.xlu0 %408, %v282
        %v410 = vpop.permute.xlu0 %409
        %v412 = vunpack.c.l.s4 839922192
        %v413 = vunpack.c.0.s8 %v412
        %v414 = vlaneseq
        %v415 = vshrl.u32 %v414, 7
        %v416 = vsub.s32 %v413, %v415
        %v417 = vrot.slane %v410, %v416
        %v419 = vmul.f32 %v281, %v417
        %v421 = vcombine.high %v419, %v419
        %v423 = vadd.f32 %v406, %v419
        %v424 = vadd.f32 %v407, %v421
        %425 = vrot.lane.b32.xlu0 %v281, 127
        %v426 = vpop.permute.xlu0 %425
        %427 = vrot.lane.b32.xlu0 %v284, 127
        %v428 = vpop.permute.xlu0 %427
        %vm429 = vcmp.lt.s32.totalorder %v291, 127
        %v430 = vsel %vm429, %v426, %v428
        %v431 = vsel %vm429, %v428, %v426
        %432 = vset.pattern.permute.xlu0 5
        %433 = vperm.xlu0 %432, %v282
        %v434 = vpop.permute.xlu0 %433
        %v436 = vmul.f32 %v430, %v434
        %v437 = vmul.f32 %v431, %v434
        %s438 = scalar_lea.vmem [#allocation5], 5
        %v439 = vld [vmem:[%s438] ss:$8 sm:$0x3]
        %v441 = vlaneseq
        %v442 = vshrl.u32 %v441, 7
        %v443 = vsub.s32 0, %v442
        %v444 = vrot.slane %v439, %v443
        %v445 = vlaneseq
        %v446 = vshrl.u32 %v445, 7
        %v447 = vsub.s32 1, %v446
        %v448 = vrot.slane %v439, %v447
        %v451 = vmul.f32 %v436, %v444
        %v452 = vmul.f32 %v437, %v448
        %v453 = vadd.f32 %v423, %v451
        %v454 = vadd.f32 %v424, %v452
        %455 = vrot.lane.b32.xlu0 %v281, 113
        %v456 = vpop.permute.xlu0 %455
        %457 = vrot.lane.b32.xlu0 %v284, 113
        %v458 = vpop.permute.xlu0 %457
        %vm459 = vcmp.lt.s32.totalorder %v291, 113
        %v460 = vsel %vm459, %v456, %v458
        %v461 = vsel %vm459, %v458, %v456
        %462 = vset.pattern.permute.xlu0 6
        %463 = vperm.xlu0 %462, %v282
        %v464 = vpop.permute.xlu0 %463
        %v466 = vmul.f32 %v460, %v464
        %v467 = vmul.f32 %v461, %v464
        %s468 = scalar_lea.vmem [#allocation5], 6
        %v469 = vld [vmem:[%s468] ss:$8 sm:$0x3]
        %v471 = vlaneseq
        %v472 = vshrl.u32 %v471, 7
        %v473 = vsub.s32 0, %v472
        %v474 = vrot.slane %v469, %v473
        %v475 = vlaneseq
        %v476 = vshrl.u32 %v475, 7
        %v477 = vsub.s32 1, %v476
        %v478 = vrot.slane %v469, %v477
        %v481 = vmul.f32 %v466, %v474
        %v482 = vmul.f32 %v467, %v478
        %v483 = vadd.f32 %v453, %v481
        %v484 = vadd.f32 %v454, %v482
        %485 = vrot.lane.b32.xlu0 %v281, 112
        %v486 = vpop.permute.xlu0 %485
        %487 = vrot.lane.b32.xlu0 %v284, 112
        %v488 = vpop.permute.xlu0 %487
        %vm489 = vcmp.lt.s32.totalorder %v291, 112
        %v490 = vsel %vm489, %v486, %v488
        %v491 = vsel %vm489, %v488, %v486
        %492 = vset.pattern.permute.xlu0 7
        %493 = vperm.xlu0 %492, %v282
        %v494 = vpop.permute.xlu0 %493
        %v496 = vmul.f32 %v490, %v494
        %v497 = vmul.f32 %v491, %v494
        %s498 = scalar_lea.vmem [#allocation5], 7
        %v499 = vld [vmem:[%s498] ss:$8 sm:$0x3]
        %v501 = vlaneseq
        %v502 = vshrl.u32 %v501, 7
        %v503 = vsub.s32 0, %v502
        %v504 = vrot.slane %v499, %v503
        %v505 = vlaneseq
        %v506 = vshrl.u32 %v505, 7
        %v507 = vsub.s32 1, %v506
        %v508 = vrot.slane %v499, %v507
        %v511 = vmul.f32 %v496, %v504
        %v512 = vmul.f32 %v497, %v508
        %v513 = vadd.f32 %v483, %v511
        %v514 = vadd.f32 %v484, %v512
        %515 = vrot.lane.b32.xlu0 %v281, 111
        %v516 = vpop.permute.xlu0 %515
        %517 = vrot.lane.b32.xlu0 %v284, 111
        %v518 = vpop.permute.xlu0 %517
        %vm519 = vcmp.lt.s32.totalorder %v291, 111
        %v520 = vsel %vm519, %v516, %v518
        %v521 = vsel %vm519, %v518, %v516
        %522 = vset.pattern.permute.xlu0 8
        %523 = vperm.xlu0 %522, %v282
        %v524 = vpop.permute.xlu0 %523
        %v526 = vmul.f32 %v520, %v524
        %v527 = vmul.f32 %v521, %v524
        %s528 = scalar_lea.vmem [#allocation5], 16
        %v529 = vld [vmem:[%s528] ss:$8 sm:$0x3]
        %v531 = vlaneseq
        %v532 = vshrl.u32 %v531, 7
        %v533 = vsub.s32 0, %v532
        %v534 = vrot.slane %v529, %v533
        %v535 = vlaneseq
        %v536 = vshrl.u32 %v535, 7
        %v537 = vsub.s32 1, %v536
        %v538 = vrot.slane %v529, %v537
        %v541 = vmul.f32 %v526, %v534
        %v542 = vmul.f32 %v527, %v538
        %v543 = vadd.f32 %v513, %v541
        %v544 = vadd.f32 %v514, %v542
        %v545 = vld [vmem:[%s280] sm:$0xf]
        %547 = vset.pattern.permute.xlu0 0
        %548 = vperm.xlu0 %547, %v545
        %v549 = vpop.permute.xlu0 %548
        %v551 = vadd.f32 %v543, %v549
        %v552 = vadd.f32 %v544, %v549
        %v553 = vmax.f32 %v551, 0.0
        %v554 = vmax.f32 %v552, 0.0
        %v557 = vcombine.low %v553, %v554
        %559 = vst [vmem:[%s272] sm:$0xff] %v557
        %s560 = sand.u32 %s145, 1
        %s561 = scalar_lea.sflag [#allocation4], %s560
        %s562 = sand.u32 %s145, 1
        %s563 = smul.addr %s562, 8
        %s564 = scalar_lea.vmem [#allocation7], %s563
        // Predicated region
        $region45: #{tpu_custom_call.1} parent=35 // pred_check
          %p565 = pneg %p155
        $region46: #{tpu_custom_call.1} parent=35 // pred_check_branch
          %567 = sbr.rel (%p565) target = $region48
        $region47: #{tpu_custom_call.1} parent=35 // pred_region
          %s569 = ssub.s32 128, 128
          %570 = vsyncadd %s561, %s569
          %s571 = smul.addr %s27, 2
          %s572 = smul.addr %s26, 2
          %s573 = sadd.s32 %s571, %s572
          %s574 = smul.addr %s573, 64
          %s575 = scalar_lea.hbm %s4, %s574
          %s577 = sshll.u32 %s564, 4
          %s578 = int_to_ptr.vmem [resolvable:$true] %s577
          %580 = dma.vmem_to_hbm [thread:$0]  %s578, 128, %s575, %s561
        $region48: #{tpu_custom_call.1} parent=35 // pred_fallthru
          _
      $region36: #{tpu_custom_call.1} parent=5 // pred_fallthru
        _
      %p581 = scmp.le.s32.totalorder 2, %s17
      // Predicated region
      $region49: #{tpu_custom_call.1} parent=5 // pred_check
        %p582 = pneg %p581
      $region50: #{tpu_custom_call.1} parent=5 // pred_check_branch
        %584 = sbr.rel (%p582) target = $region52
      $region51: #{tpu_custom_call.1} parent=5 // pred_region
        %s585 = ssub.s32 %s17, 2
        // Predicated region
        $region53: #{tpu_custom_call.1} parent=51 // pred_check
          %p586 = pneg %p161
        $region54: #{tpu_custom_call.1} parent=51 // pred_check_branch
          %588 = sbr.rel (%p586) target = $region56
        $region55: #{tpu_custom_call.1} parent=51 // pred_region
          %s589 = sand.u32 %s146, 1
          %s590 = scalar_lea.sflag [#allocation4], %s589
          %s591 = sand.u32 %s146, 1
          %s592 = smul.addr %s591, 8
          %s593 = scalar_lea.vmem [#allocation7], %s592
          %594 = dma.done %s590, 128
        $region56: #{tpu_custom_call.1} parent=51 // pred_fallthru
          _
      $region52: #{tpu_custom_call.1} parent=5 // pred_fallthru
        _
    $region6: #{tpu_custom_call.1} parent=1 // loop_footer
      %s21 = sadd.s32 1, %s17
    $region7: #{tpu_custom_call.1} parent=1 // loop_footer_branch
      %16 = sbr.rel target = $region3
    $region8: #{tpu_custom_call.1} parent=1 // loop_exit
      _
    %595 = vsyncpa [#allocation3], 1
    %s596 = scalar_lea.sflag [#allocation3], 1
    %597 = vsyncpa %s596, 1
    %598 = vsyncpa [#allocation6], 1
    %599 = vsyncpa [#allocation4], 1
    %s600 = scalar_lea.sflag [#allocation4], 1
    %601 = vsyncpa %s600, 1

</llo_original>
